<compile_context>
chip_gen: v6e
topology: v6e:2x2x1
jax: 0.10.0
libtpu: 0.0.40
codegen_flags: <defaults>
</compile_context>

<pallas_src>
import functools

import jax
import jax.numpy as jnp
import numpy as np
from jax.experimental import pallas as pl
from jax.experimental.pallas import tpu as pltpu

_HALF_LOG_2PI = 0.5 * float(np.log(2.0 * np.pi))


# ----------------------------------------------------------------------------
# Pallas kernel: one batch tile (on lanes) of the full forward pass.
# Weights / biases / std / log-prob constant are grid-invariant VMEM blocks.
# ----------------------------------------------------------------------------
def _gaussian_policy_kernel(x_ref, w1_ref, b1_ref, w2_ref, b2_ref, w3_ref, b3_ref,
                            std_ref, c_ref, noise_ref, out_ref, *, act_dim):
    A = act_dim
    x = x_ref[...]                                                         # [D_in, TB]

    # hidden layer 1: tanh(W1 @ x + b1)
    h1 = jnp.tanh(jnp.dot(w1_ref[...], x,
                          preferred_element_type=jnp.float32) + b1_ref[...])   # [H1, TB]
    # hidden layer 2: tanh(W2 @ h1 + b2)
    h2 = jnp.tanh(jnp.dot(w2_ref[...], h1,
                          preferred_element_type=jnp.float32) + b2_ref[...])   # [H2, TB]
    # output layer; W3/b3 are pre-scaled by output_limit in the wrapper
    mu = jnp.dot(w3_ref[...], h2,
                 preferred_element_type=jnp.float32) + b3_ref[...]             # [A, TB]

    eps = noise_ref[...]                                                   # [A, TB]
    # pi = output_limit * (mu_unscaled + std*eps) == mu_scaled + (output_limit*std)*eps
    pi = mu + std_ref[...] * eps                                           # [A, TB]

    # log_pi = -0.5*sum(eps^2) - (sum(log_std) + A*0.5*log(2*pi));  c is grid-invariant.
    logpi = -0.5 * jnp.sum(eps * eps, axis=0, keepdims=True) - c_ref[...]  # [1, TB]

    # fused lane-dense output slab: rows [0:A]=mu, [A:2A]=pi, [2A]=log_pi
    out_ref[0:A, :] = mu
    out_ref[A:2 * A, :] = pi
    out_ref[2 * A:2 * A + 1, :] = logpi


def _round_up(n, m):
    return ((n + m - 1) // m) * m


def gaussian_policy_forward(x, params, noise, output_limit=1.0, block_batch=16384):
    """GaussianPolicy forward as one batch-tiled (batch-on-lanes) Pallas call.

    x: [B, D_in] float32; noise: [B, A] standard-normal samples.
    Returns (mu [B, A], std [A], pi [B, A], log_pi [B]).
    """
    B, D_in = x.shape
    H1 = params["w1"].shape[0]
    H2 = params["w2"].shape[0]
    A = params["w3"].shape[0]
    f32 = jnp.float32

    log_std = params["log_std"]                      # [A, 1]
    std = jnp.exp(log_std)                           # [A, 1]  (returned unscaled, as in PyTorch)

    # Fold output_limit into the tiny parameters once (not into per-element data).
    ol = jnp.asarray(output_limit, f32)
    w3_s = params["w3"] * ol
    b3_s = params["b3"] * ol
    std_s = std * ol
    # Grid-invariant log-prob constant.
    c = (jnp.sum(log_std) + A * _HALF_LOG_2PI).reshape(1, 1).astype(f32)

    # Batch-on-lanes layout (wrapper-side transpose is layout plumbing).
    xT = jnp.asarray(x, f32).T                       # [D_in, B]
    noiseT = jnp.asarray(noise, f32).T               # [A, B]

    # Lane tile: multiple of 128; keep >= 2 grid steps when B allows it (v7x: 2 TensorCores).
    tb = min(int(block_batch), _round_up(B, 128))
    if B > 128:
        tb = min(tb, _round_up(pl.cdiv(B, 2), 128))
    tb = max(128, (tb // 128) * 128)
    Bp = _round_up(B, tb)
    if Bp != B:
        pad = Bp - B
        xT = jnp.pad(xT, ((0, 0), (0, pad)))
        noiseT = jnp.pad(noiseT, ((0, 0), (0, pad)))

    grid = (Bp // tb,)
    R = 2 * A + 1                                    # fused output slab rows (mu | pi | log_pi)

    batch_map = lambda i: (0, i)                     # tiled along lanes (batch)
    const_map = lambda i: (0, 0)                     # grid-invariant, VMEM-resident

    in_specs = [
        pl.BlockSpec((D_in, tb), batch_map),         # x^T
        pl.BlockSpec((H1, D_in), const_map),         # W1  [out, in]
        pl.BlockSpec((H1, 1), const_map),            # b1 column
        pl.BlockSpec((H2, H1), const_map),           # W2
        pl.BlockSpec((H2, 1), const_map),            # b2
        pl.BlockSpec((A, H2), const_map),            # W3 * output_limit
        pl.BlockSpec((A, 1), const_map),             # b3 * output_limit
        pl.BlockSpec((A, 1), const_map),             # std * output_limit
        pl.BlockSpec((1, 1), const_map),             # log-prob constant c
        pl.BlockSpec((A, tb), batch_map),            # noise^T
    ]
    out_specs = pl.BlockSpec((R, tb), batch_map)
    out_shape = jax.ShapeDtypeStruct((R, Bp), f32)

    kernel = functools.partial(_gaussian_policy_kernel, act_dim=A)

    out = pl.pallas_call(
        kernel,
        out_shape=out_shape,
        grid_spec=pltpu.PrefetchScalarGridSpec(
            num_scalar_prefetch=0,
            grid=grid,
            in_specs=in_specs,
            out_specs=out_specs,
        ),
        compiler_params=pltpu.CompilerParams(
            dimension_semantics=("parallel",),       # batch axis shards across TCs (v7x megacore)
            vmem_limit_bytes=48 * 1024 * 1024,       # above v5e's 16 MiB default, below v7x's 64 MiB physical
        ),
    )(xT, params["w1"], params["b1"], params["w2"], params["b2"],
      w3_s, b3_s, std_s, c, noiseT)

    mu = out[0:A, :B].T                              # [B, A]
    pi = out[A:2 * A, :B].T                          # [B, A]
    log_pi = out[2 * A, :B]                          # [B]
    return mu, std[:, 0], pi, log_pi


# ----------------------------------------------------------------------------
# Deterministic parameter init (mirrors nn.init.orthogonal_ + zero bias).
# Weights stay in PyTorch [out, in] orientation; biases/log_std stored as columns.
# ----------------------------------------------------------------------------
def _orthogonal(key, rows, cols, gain):
    a = jax.random.normal(key, (max(rows, cols), min(rows, cols)), dtype=jnp.float32)
    q, r = jnp.linalg.qr(a)
    q = q * jnp.sign(jnp.diagonal(r))
    if rows < cols:
        q = q.T
    return gain * q[:rows, :cols]


def make_params(key, input_size, hidden_sizes, output_size):
    k1, k2, k3 = jax.random.split(key, 3)
    h1, h2 = hidden_sizes
    return {
        "w1": _orthogonal(k1, h1, input_size, gain=0.1),      # [H1, D_in]
        "b1": jnp.zeros((h1, 1), jnp.float32),
        "w2": _orthogonal(k2, h2, h1, gain=0.1),               # [H2, H1]
        "b2": jnp.zeros((h2, 1), jnp.float32),
        "w3": _orthogonal(k3, output_size, h2, gain=1.0),      # [A, H2]
        "b3": jnp.zeros((output_size, 1), jnp.float32),
        "log_std": jnp.ones((output_size, 1), jnp.float32),
    }


# ----------------------------------------------------------------------------
# Pure-JAX reference for the correctness spot-check.
# ----------------------------------------------------------------------------
def reference_forward(x, params, noise, output_limit=1.0):
    h1 = jnp.tanh(x @ params["w1"].T + params["b1"][:, 0])
    h2 = jnp.tanh(h1 @ params["w2"].T + params["b2"][:, 0])
    mu = h2 @ params["w3"].T + params["b3"][:, 0]
    log_std = params["log_std"][:, 0]
    std = jnp.exp(log_std)
    pi = mu + std * noise
    z = (pi - mu) / std
    log_pi = jnp.sum(-0.5 * z * z - log_std - 0.5 * jnp.log(2.0 * jnp.pi), axis=-1)
    return mu * output_limit, std, pi * output_limit, log_pi


if __name__ == "__main__":
    key = jax.random.PRNGKey(0)
    k_param, k_x, k_noise = jax.random.split(key, 3)

    batch = 24               # small; padded to one 128-lane tile
    input_size = 8           # observation dim
    hidden_sizes = (64, 64)
    output_size = 4          # action dim
    output_limit = 1.5       # exercises the output_limit fold

    params = make_params(k_param, input_size, hidden_sizes, output_size)
    x = jax.random.normal(k_x, (batch, input_size), dtype=jnp.float32)
    noise = jax.random.normal(k_noise, (batch, output_size), dtype=jnp.float32)

    mu, std, pi, log_pi = gaussian_policy_forward(x, params, noise, output_limit)
    jax.block_until_ready((mu, std, pi, log_pi))

    mu_r, std_r, pi_r, log_pi_r = reference_forward(x, params, noise, output_limit)
    assert np.allclose(np.asarray(mu), np.asarray(mu_r), atol=1e-5)
    assert np.allclose(np.asarray(std), np.asarray(std_r), atol=1e-5)
    assert np.allclose(np.asarray(pi), np.asarray(pi_r), atol=1e-5)
    assert np.allclose(np.asarray(log_pi), np.asarray(log_pi_r), atol=1e-4)

    print("KERNEL_OK")
</pallas_src>

<mosaic_0001>
module attributes {stable_mosaic.version = 11 : i64} {
  func.func @_gaussian_policy_kernel(%arg0: i32, %arg1: memref<8x128xf32, #tpu.memory_space<vmem>>, %arg2: memref<64x8xf32, #tpu.memory_space<vmem>>, %arg3: memref<64x1xf32, #tpu.memory_space<vmem>>, %arg4: memref<64x64xf32, #tpu.memory_space<vmem>>, %arg5: memref<64x1xf32, #tpu.memory_space<vmem>>, %arg6: memref<4x64xf32, #tpu.memory_space<vmem>>, %arg7: memref<4x1xf32, #tpu.memory_space<vmem>>, %arg8: memref<4x1xf32, #tpu.memory_space<vmem>>, %arg9: memref<1x1xf32, #tpu.memory_space<vmem>>, %arg10: memref<4x128xf32, #tpu.memory_space<vmem>>, %arg11: memref<9x128xf32, #tpu.memory_space<vmem>>) attributes {dimension_semantics = [#tpu.dimension_semantics<parallel>], iteration_bounds = array<i64: 1>, scalar_prefetch = 0 : i64, scratch_operands = 0 : i64, tpu.core_type = #tpu.core_type<tc>, window_params = [{transform_indices = @transform_0, window_bounds = array<i64: 8, 128>}, {pipeline_mode = #tpu.pipeline_mode<synchronous>, transform_indices = @transform_1, window_bounds = array<i64: 64, 8>}, {pipeline_mode = #tpu.pipeline_mode<synchronous>, transform_indices = @transform_2, window_bounds = array<i64: 64, 1>}, {pipeline_mode = #tpu.pipeline_mode<synchronous>, transform_indices = @transform_3, window_bounds = array<i64: 64, 64>}, {pipeline_mode = #tpu.pipeline_mode<synchronous>, transform_indices = @transform_4, window_bounds = array<i64: 64, 1>}, {pipeline_mode = #tpu.pipeline_mode<synchronous>, transform_indices = @transform_5, window_bounds = array<i64: 4, 64>}, {pipeline_mode = #tpu.pipeline_mode<synchronous>, transform_indices = @transform_6, window_bounds = array<i64: 4, 1>}, {pipeline_mode = #tpu.pipeline_mode<synchronous>, transform_indices = @transform_7, window_bounds = array<i64: 4, 1>}, {pipeline_mode = #tpu.pipeline_mode<synchronous>, transform_indices = @transform_8, window_bounds = array<i64: 1, 1>}, {transform_indices = @transform_9, window_bounds = array<i64: 4, 128>}, {transform_indices = @transform_10, window_bounds = array<i64: 9, 128>}]} {
    %c0 = arith.constant 0 : index
    %c0_0 = arith.constant 0 : index
    %0 = vector.load %arg1[%c0, %c0_0] : memref<8x128xf32, #tpu.memory_space<vmem>>, vector<8x128xf32>
    %c0_1 = arith.constant 0 : index
    %c0_2 = arith.constant 0 : index
    %1 = vector.load %arg2[%c0_1, %c0_2] : memref<64x8xf32, #tpu.memory_space<vmem>>, vector<64x8xf32>
    %cst = arith.constant dense<0.000000e+00> : vector<64x128xf32>
    %2 = tpu.matmul %1, %0, %cst {dimension_numbers = #tpu.dot_dimension_numbers<[1], [0], [0], [1], [0, 0, 1, 1], [], []>} : vector<64x8xf32>, vector<8x128xf32>, vector<64x128xf32> -> vector<64x128xf32>
    %c0_3 = arith.constant 0 : index
    %c0_4 = arith.constant 0 : index
    %3 = vector.load %arg3[%c0_3, %c0_4] : memref<64x1xf32, #tpu.memory_space<vmem>>, vector<64x1xf32>
    %4 = vector.broadcast %3 : vector<64x1xf32> to vector<64x128xf32>
    %5 = arith.addf %2, %4 : vector<64x128xf32>
    %6 = math.tanh %5 : vector<64x128xf32>
    %c0_5 = arith.constant 0 : index
    %c0_6 = arith.constant 0 : index
    %7 = vector.load %arg4[%c0_5, %c0_6] : memref<64x64xf32, #tpu.memory_space<vmem>>, vector<64x64xf32>
    %cst_7 = arith.constant dense<0.000000e+00> : vector<64x128xf32>
    %8 = tpu.matmul %7, %6, %cst_7 {dimension_numbers = #tpu.dot_dimension_numbers<[1], [0], [0], [1], [0, 0, 1, 1], [], []>} : vector<64x64xf32>, vector<64x128xf32>, vector<64x128xf32> -> vector<64x128xf32>
    %c0_8 = arith.constant 0 : index
    %c0_9 = arith.constant 0 : index
    %9 = vector.load %arg5[%c0_8, %c0_9] : memref<64x1xf32, #tpu.memory_space<vmem>>, vector<64x1xf32>
    %10 = vector.broadcast %9 : vector<64x1xf32> to vector<64x128xf32>
    %11 = arith.addf %8, %10 : vector<64x128xf32>
    %12 = math.tanh %11 : vector<64x128xf32>
    %c0_10 = arith.constant 0 : index
    %c0_11 = arith.constant 0 : index
    %13 = vector.load %arg6[%c0_10, %c0_11] : memref<4x64xf32, #tpu.memory_space<vmem>>, vector<4x64xf32>
    %cst_12 = arith.constant dense<0.000000e+00> : vector<4x128xf32>
    %14 = tpu.matmul %13, %12, %cst_12 {dimension_numbers = #tpu.dot_dimension_numbers<[1], [0], [0], [1], [0, 0, 1, 1], [], []>} : vector<4x64xf32>, vector<64x128xf32>, vector<4x128xf32> -> vector<4x128xf32>
    %c0_13 = arith.constant 0 : index
    %c0_14 = arith.constant 0 : index
    %15 = vector.load %arg7[%c0_13, %c0_14] : memref<4x1xf32, #tpu.memory_space<vmem>>, vector<4x1xf32>
    %16 = vector.broadcast %15 : vector<4x1xf32> to vector<4x128xf32>
    %17 = arith.addf %14, %16 : vector<4x128xf32>
    %c0_15 = arith.constant 0 : index
    %c0_16 = arith.constant 0 : index
    %18 = vector.load %arg10[%c0_15, %c0_16] : memref<4x128xf32, #tpu.memory_space<vmem>>, vector<4x128xf32>
    %c0_17 = arith.constant 0 : index
    %c0_18 = arith.constant 0 : index
    %19 = vector.load %arg8[%c0_17, %c0_18] : memref<4x1xf32, #tpu.memory_space<vmem>>, vector<4x1xf32>
    %20 = vector.broadcast %19 : vector<4x1xf32> to vector<4x128xf32>
    %21 = arith.mulf %20, %18 : vector<4x128xf32>
    %22 = arith.addf %17, %21 : vector<4x128xf32>
    %23 = arith.mulf %18, %18 : vector<4x128xf32>
    %cst_19 = arith.constant dense<0.000000e+00> : vector<128xf32>
    %24 = vector.multi_reduction <add>, %23, %cst_19 [0] : vector<4x128xf32> to vector<128xf32>
    %25 = vector.shape_cast %24 : vector<128xf32> to vector<1x128xf32>
    %cst_20 = arith.constant -5.000000e-01 : f32
    %26 = vector.broadcast %cst_20 : f32 to vector<1x128xf32>
    %27 = arith.mulf %26, %25 : vector<1x128xf32>
    %c0_21 = arith.constant 0 : index
    %c0_22 = arith.constant 0 : index
    %28 = vector.load %arg9[%c0_21, %c0_22] : memref<1x1xf32, #tpu.memory_space<vmem>>, vector<1x1xf32>
    %29 = vector.broadcast %28 : vector<1x1xf32> to vector<1x128xf32>
    %30 = arith.subf %27, %29 : vector<1x128xf32>
    %c0_23 = arith.constant 0 : index
    %c0_24 = arith.constant 0 : index
    %31 = vector.load %arg11[%c0_23, %c0_24] : memref<9x128xf32, #tpu.memory_space<vmem>>, vector<4x128xf32>
    tpu.vector_store %arg11[%c0_23, %c0_24], %17 {strides = array<i32>} : memref<9x128xf32, #tpu.memory_space<vmem>>, vector<4x128xf32>,
    %c4 = arith.constant 4 : index
    %c0_25 = arith.constant 0 : index
    %32 = vector.load %arg11[%c4, %c0_25] : memref<9x128xf32, #tpu.memory_space<vmem>>, vector<4x128xf32>
    tpu.vector_store %arg11[%c4, %c0_25], %22 {strides = array<i32>} : memref<9x128xf32, #tpu.memory_space<vmem>>, vector<4x128xf32>,
    %c8 = arith.constant 8 : index
    %c0_26 = arith.constant 0 : index
    %33 = vector.load %arg11[%c8, %c0_26] : memref<9x128xf32, #tpu.memory_space<vmem>>, vector<1x128xf32>
    tpu.vector_store %arg11[%c8, %c0_26], %30 {strides = array<i32>} : memref<9x128xf32, #tpu.memory_space<vmem>>, vector<1x128xf32>,
    return
  }
  func.func @transform_0(%arg0: i32) -> (i32, i32) {
    %c0_i32 = arith.constant 0 : i32
    %c0_i32_0 = arith.constant 0 : i32
    return %c0_i32, %arg0 : i32, i32
  }
  func.func @transform_1(%arg0: i32) -> (i32, i32) {
    %c0_i32 = arith.constant 0 : i32
    %c0_i32_0 = arith.constant 0 : i32
    %c0_i32_1 = arith.constant 0 : i32
    return %c0_i32, %c0_i32_0 : i32, i32
  }
  func.func @transform_2(%arg0: i32) -> (i32, i32) {
    %c0_i32 = arith.constant 0 : i32
    %c0_i32_0 = arith.constant 0 : i32
    %c0_i32_1 = arith.constant 0 : i32
    return %c0_i32, %c0_i32_0 : i32, i32
  }
  func.func @transform_3(%arg0: i32) -> (i32, i32) {
    %c0_i32 = arith.constant 0 : i32
    %c0_i32_0 = arith.constant 0 : i32
    %c0_i32_1 = arith.constant 0 : i32
    return %c0_i32, %c0_i32_0 : i32, i32
  }
  func.func @transform_4(%arg0: i32) -> (i32, i32) {
    %c0_i32 = arith.constant 0 : i32
    %c0_i32_0 = arith.constant 0 : i32
    %c0_i32_1 = arith.constant 0 : i32
    return %c0_i32, %c0_i32_0 : i32, i32
  }
  func.func @transform_5(%arg0: i32) -> (i32, i32) {
    %c0_i32 = arith.constant 0 : i32
    %c0_i32_0 = arith.constant 0 : i32
    %c0_i32_1 = arith.constant 0 : i32
    return %c0_i32, %c0_i32_0 : i32, i32
  }
  func.func @transform_6(%arg0: i32) -> (i32, i32) {
    %c0_i32 = arith.constant 0 : i32
    %c0_i32_0 = arith.constant 0 : i32
    %c0_i32_1 = arith.constant 0 : i32
    return %c0_i32, %c0_i32_0 : i32, i32
  }
  func.func @transform_7(%arg0: i32) -> (i32, i32) {
    %c0_i32 = arith.constant 0 : i32
    %c0_i32_0 = arith.constant 0 : i32
    %c0_i32_1 = arith.constant 0 : i32
    return %c0_i32, %c0_i32_0 : i32, i32
  }
  func.func @transform_8(%arg0: i32) -> (i32, i32) {
    %c0_i32 = arith.constant 0 : i32
    %c0_i32_0 = arith.constant 0 : i32
    %c0_i32_1 = arith.constant 0 : i32
    return %c0_i32, %c0_i32_0 : i32, i32
  }
  func.func @transform_9(%arg0: i32) -> (i32, i32) {
    %c0_i32 = arith.constant 0 : i32
    %c0_i32_0 = arith.constant 0 : i32
    return %c0_i32, %arg0 : i32, i32
  }
  func.func @transform_10(%arg0: i32) -> (i32, i32) {
    %c0_i32 = arith.constant 0 : i32
    %c0_i32_0 = arith.constant 0 : i32
    return %c0_i32, %arg0 : i32, i32
  }
}

</mosaic_0001>

<llo_original>
// kernel: tpu_custom_call.1
$region0: #{tpu_custom_call.1}
  #allocation0 [shape = 'u32[]', space=smem, size = 0x4, offset = 0x4, fixed_abs, tag = 'smem constant byte address 0x4 - core index']
  #allocation1 [shape = 'u32[144,128]{1,0:T(1,128)}', space=vmem, size = 0x12000, scoped, tag = 'internal scratch']
  #allocation2 [shape = 'f32[1,1]{1,0:T(1,128)S(1)}', space=vmem, size = 0x200, scoped, tag = 'scoped memory for tpu_custom_call.1']
  %s0 = inlined_call_operand.vmem [shape: f32[8,128], index: 0, kind: input, shape index: {}]
  %s1 = inlined_call_operand.vmem [shape: f32[64,8], index: 1, kind: input, shape index: {}]
  %s2 = inlined_call_operand.vmem [shape: f32[64,1], index: 2, kind: input, shape index: {}]
  %s3 = inlined_call_operand.vmem [shape: f32[64,64], index: 3, kind: input, shape index: {}]
  %s4 = inlined_call_operand.vmem [shape: f32[64,1], index: 4, kind: input, shape index: {}]
  %s5 = inlined_call_operand.vmem [shape: f32[4,64], index: 5, kind: input, shape index: {}]
  %s6 = inlined_call_operand.vmem [shape: f32[4,1], index: 6, kind: input, shape index: {}]
  %s7 = inlined_call_operand.vmem [shape: f32[4,1], index: 7, kind: input, shape index: {}]
  %s8 = inlined_call_operand.<no memory space> [shape: f32[1,1], index: 8, kind: input, shape index: {}]
  %s9 = inlined_call_operand.vmem [shape: f32[4,128], index: 9, kind: input, shape index: {}]
  %s10 = inlined_call_operand.hbm [shape: f32[9,128], index: 10, kind: output, shape index: {}]
  %s11 = sld [smem:[#allocation0]]
  $region50: #{tpu_custom_call.1} parent=0
    _
  %s13 = ssub.s32 1, %s11
  %s14 = scalar_select 0, %s13, %s11
  %v15 = vstv %s8
  %16 = vst [vmem:[#allocation2] sm:$0x1] %v15
  $region1: #{tpu_custom_call.1} parent=0
    #allocation3 [shape = 'u8[8192]{0}', space=vmem, size = 0x2000, scoped, tag = 'output window, operand 0, single buffered']
    #allocation4 [shape = 's32[1]{0}', space=sflag, size = 0x4, scoped, tag = 'scoped memory for tpu_custom_call.1']
    %17 = vsyncpa [#allocation4], 0
    // Predicated region
    $region2: #{tpu_custom_call.1} parent=1 // pred_check
      _
    $region3: #{tpu_custom_call.1} parent=1 // pred_check_branch
      %19 = sbr.rel (0) target = $region5
    $region4: #{tpu_custom_call.1} parent=1 // pred_region
      _
    $region5: #{tpu_custom_call.1} parent=1 // pred_fallthru
      _
    // Predicated region
    $region6: #{tpu_custom_call.1} parent=1 // pred_check
      _
    $region7: #{tpu_custom_call.1} parent=1 // pred_check_branch
      %21 = sbr.rel (0) target = $region9
    $region8: #{tpu_custom_call.1} parent=1 // pred_region
      _
    $region9: #{tpu_custom_call.1} parent=1 // pred_fallthru
      _
    // Predicated region
    $region10: #{tpu_custom_call.1} parent=1 // pred_check
      _
    $region11: #{tpu_custom_call.1} parent=1 // pred_check_branch
      %23 = sbr.rel (0) target = $region13
    $region12: #{tpu_custom_call.1} parent=1 // pred_region
      _
    $region13: #{tpu_custom_call.1} parent=1 // pred_fallthru
      _
    // Predicated region
    $region14: #{tpu_custom_call.1} parent=1 // pred_check
      _
    $region15: #{tpu_custom_call.1} parent=1 // pred_check_branch
      %25 = sbr.rel (0) target = $region17
    $region16: #{tpu_custom_call.1} parent=1 // pred_region
      _
    $region17: #{tpu_custom_call.1} parent=1 // pred_fallthru
      _
    // Predicated region
    $region18: #{tpu_custom_call.1} parent=1 // pred_check
      _
    $region19: #{tpu_custom_call.1} parent=1 // pred_check_branch
      %27 = sbr.rel (0) target = $region21
    $region20: #{tpu_custom_call.1} parent=1 // pred_region
      _
    $region21: #{tpu_custom_call.1} parent=1 // pred_fallthru
      _
    // Predicated region
    $region22: #{tpu_custom_call.1} parent=1 // pred_check
      _
    $region23: #{tpu_custom_call.1} parent=1 // pred_check_branch
      %29 = sbr.rel (0) target = $region25
    $region24: #{tpu_custom_call.1} parent=1 // pred_region
      _
    $region25: #{tpu_custom_call.1} parent=1 // pred_fallthru
      _
    // Predicated region
    $region26: #{tpu_custom_call.1} parent=1 // pred_check
      _
    $region27: #{tpu_custom_call.1} parent=1 // pred_check_branch
      %31 = sbr.rel (0) target = $region29
    $region28: #{tpu_custom_call.1} parent=1 // pred_region
      _
    $region29: #{tpu_custom_call.1} parent=1 // pred_fallthru
      _
    // Predicated region
    $region30: #{tpu_custom_call.1} parent=1 // pred_check
      _
    $region31: #{tpu_custom_call.1} parent=1 // pred_check_branch
      %33 = sbr.rel (0) target = $region33
    $region32: #{tpu_custom_call.1} parent=1 // pred_region
      _
    $region33: #{tpu_custom_call.1} parent=1 // pred_fallthru
      _
    // Predicated region
    $region34: #{tpu_custom_call.1} parent=1 // pred_check
      _
    $region35: #{tpu_custom_call.1} parent=1 // pred_check_branch
      %35 = sbr.rel (0) target = $region37
    $region36: #{tpu_custom_call.1} parent=1 // pred_region
      _
    $region37: #{tpu_custom_call.1} parent=1 // pred_fallthru
      _
    // Predicated region
    $region38: #{tpu_custom_call.1} parent=1 // pred_check
      _
    $region39: #{tpu_custom_call.1} parent=1 // pred_check_branch
      %37 = sbr.rel (0) target = $region41
    $region40: #{tpu_custom_call.1} parent=1 // pred_region
      _
    $region41: #{tpu_custom_call.1} parent=1 // pred_fallthru
      _
    %v38 = vld [vmem:[%s0] sm:$0xff]
    %v39 = vld [vmem:[%s1] sm:$0xff]
    %v40 = vld [vmem:[%s1 + $0x8] sm:$0xff]
    %v41 = vld [vmem:[%s1 + $0x10] sm:$0xff]
    %v42 = vld [vmem:[%s1 + $0x18] sm:$0xff]
    %v43 = vld [vmem:[%s1 + $0x20] sm:$0xff]
    %v44 = vld [vmem:[%s1 + $0x28] sm:$0xff]
    %v45 = vld [vmem:[%s1 + $0x30] sm:$0xff]
    %v46 = vld [vmem:[%s1 + $0x38] sm:$0xff]
    %v47 = vld [vmem:[%s2] sm:$0xff]
    %v48 = vld [vmem:[%s2 + $0x8] sm:$0xff]
    %v49 = vld [vmem:[%s2 + $0x10] sm:$0xff]
    %v50 = vld [vmem:[%s2 + $0x18] sm:$0xff]
    %v51 = vld [vmem:[%s2 + $0x20] sm:$0xff]
    %v52 = vld [vmem:[%s2 + $0x28] sm:$0xff]
    %v53 = vld [vmem:[%s2 + $0x30] sm:$0xff]
    %v54 = vld [vmem:[%s2 + $0x38] sm:$0xff]
    %56 = vset.pattern.permute.xlu0 0
    %57 = vperm.xlu0 %56, %v47
    %v58 = vpop.permute.xlu0 %57
    %61 = vset.pattern.permute.xlu0 0
    %62 = vperm.xlu0 %61, %v48
    %v63 = vpop.permute.xlu0 %62
    %66 = vset.pattern.permute.xlu0 0
    %67 = vperm.xlu0 %66, %v49
    %v68 = vpop.permute.xlu0 %67
    %71 = vset.pattern.permute.xlu0 0
    %72 = vperm.xlu0 %71, %v50
    %v73 = vpop.permute.xlu0 %72
    %76 = vset.pattern.permute.xlu0 0
    %77 = vperm.xlu0 %76, %v51
    %v78 = vpop.permute.xlu0 %77
    %81 = vset.pattern.permute.xlu0 0
    %82 = vperm.xlu0 %81, %v52
    %v83 = vpop.permute.xlu0 %82
    %86 = vset.pattern.permute.xlu0 0
    %87 = vperm.xlu0 %86, %v53
    %v88 = vpop.permute.xlu0 %87
    %91 = vset.pattern.permute.xlu0 0
    %92 = vperm.xlu0 %91, %v54
    %v93 = vpop.permute.xlu0 %92
    %vm95 = vcmask 64512
    %v97 = vsel %vm95, %v39, 0
    %v100 = vsel %vm95, %v40, 0
    %v103 = vsel %vm95, %v41, 0
    %v106 = vsel %vm95, %v42, 0
    %v109 = vsel %vm95, %v43, 0
    %v112 = vsel %vm95, %v44, 0
    %v115 = vsel %vm95, %v45, 0
    %v118 = vsel %vm95, %v46, 0
    %120 = vmatprep.subr.mxu0 0.0
    %121 = vmatpush1.msra.mxu0 0.0
    %122 = vmatprep.subr.mxu0 0.0
    %123 = vmatpush1.msra.mxu0 0.0
    %124 = vmatprep.subr.mxu0 0.0
    %125 = vmatpush1.msra.mxu0 0.0
    %126 = vmatprep.subr.mxu0 0.0
    %127 = vmatpush1.msra.mxu0 0.0
    %128 = vmatprep.subr.mxu0 0.0
    %129 = vmatpush1.msra.mxu0 0.0
    %130 = vmatprep.subr.mxu0 0.0
    %131 = vmatpush1.msra.mxu0 0.0
    %132 = vmatprep.subr.mxu0 0.0
    %133 = vmatpush1.msra.mxu0 0.0
    %134 = vmatprep.subr.mxu0 0.0
    %135 = vmatpush1.msra.mxu0 0.0
    %136 = vmatprep.subr.mxu0 0.0
    %137 = vmatpush1.msra.mxu0 0.0
    %138 = vmatprep.subr.mxu0 0.0
    %139 = vmatpush1.msra.mxu0 0.0
    %140 = vmatprep.subr.mxu0 0.0
    %141 = vmatpush1.msra.mxu0 0.0
    %142 = vmatprep.subr.mxu0 0.0
    %143 = vmatpush1.msra.mxu0 0.0
    %144 = vmatprep.subr.mxu0 0.0
    %145 = vmatpush1.msra.mxu0 0.0
    %146 = vmatprep.subr.mxu0 0.0
    %147 = vmatpush1.msra.mxu0 0.0
    %148 = vmatprep.subr.mxu0 0.0
    %149 = vmatpush1.msra.mxu0 0.0
    %150 = vmatprep.subr.mxu0 0.0
    %151 = vmatpush1.msra.mxu0 %v38
    %152 = vmatprep.subr.mxu0 0.0
    %153 = vmatpush2.msra.mxu0 0.0
    %154 = vmatprep.subr.mxu0 0.0
    %155 = vmatpush2.msra.mxu0 0.0
    %156 = vmatprep.subr.mxu0 0.0
    %157 = vmatpush2.msra.mxu0 0.0
    %158 = vmatprep.subr.mxu0 0.0
    %159 = vmatpush2.msra.mxu0 0.0
    %160 = vmatprep.subr.mxu0 0.0
    %161 = vmatpush2.msra.mxu0 0.0
    %162 = vmatprep.subr.mxu0 0.0
    %163 = vmatpush2.msra.mxu0 0.0
    %164 = vmatprep.subr.mxu0 0.0
    %165 = vmatpush2.msra.mxu0 0.0
    %166 = vmatprep.subr.mxu0 0.0
    %167 = vmatpush2.msra.mxu0 0.0
    %168 = vmatprep.subr.mxu0 0.0
    %169 = vmatpush2.msra.mxu0 0.0
    %170 = vmatprep.subr.mxu0 0.0
    %171 = vmatpush2.msra.mxu0 0.0
    %172 = vmatprep.subr.mxu0 0.0
    %173 = vmatpush2.msra.mxu0 0.0
    %174 = vmatprep.subr.mxu0 0.0
    %175 = vmatpush2.msra.mxu0 0.0
    %176 = vmatprep.subr.mxu0 0.0
    %177 = vmatpush2.msra.mxu0 0.0
    %178 = vmatprep.subr.mxu0 0.0
    %179 = vmatpush2.msra.mxu0 0.0
    %180 = vmatprep.subr.mxu0 0.0
    %181 = vmatpush2.msra.mxu0 0.0
    %182 = vmatprep.subr.mxu0 0.0
    %183 = vmatpush2.msra.mxu0 0.0
    %184 = vmatprep.mubr.f32.mxu0 0.0
    %185 = vmatmul.mubr.f32.gmra.mxu0 %v97
    %v186 = vpop.f32.mrf.mxu0
    %v187 = vadd.f32 %v58, %v186
    %v188 = vpop.f32.mrf.mxu0
    %189 = vmatprep.mubr.f32.mxu0 0.0
    %190 = vmatmul.mubr.f32.gmra.mxu0 %v100
    %v191 = vpop.f32.mrf.mxu0
    %v192 = vadd.f32 %v63, %v191
    %v193 = vpop.f32.mrf.mxu0
    %194 = vmatprep.mubr.f32.mxu0 0.0
    %195 = vmatmul.mubr.f32.gmra.mxu0 %v103
    %v196 = vpop.f32.mrf.mxu0
    %v197 = vadd.f32 %v68, %v196
    %v198 = vpop.f32.mrf.mxu0
    %199 = vmatprep.mubr.f32.mxu0 0.0
    %200 = vmatmul.mubr.f32.gmra.mxu0 %v106
    %v201 = vpop.f32.mrf.mxu0
    %v202 = vadd.f32 %v73, %v201
    %v203 = vpop.f32.mrf.mxu0
    %204 = vmatprep.mubr.f32.mxu0 0.0
    %205 = vmatmul.mubr.f32.gmra.mxu0 %v109
    %v206 = vpop.f32.mrf.mxu0
    %v207 = vadd.f32 %v78, %v206
    %v208 = vpop.f32.mrf.mxu0
    %209 = vmatprep.mubr.f32.mxu0 0.0
    %210 = vmatmul.mubr.f32.gmra.mxu0 %v112
    %v211 = vpop.f32.mrf.mxu0
    %v212 = vadd.f32 %v83, %v211
    %v213 = vpop.f32.mrf.mxu0
    %214 = vmatprep.mubr.f32.mxu0 0.0
    %215 = vmatmul.mubr.f32.gmra.mxu0 %v115
    %v216 = vpop.f32.mrf.mxu0
    %v217 = vadd.f32 %v88, %v216
    %v218 = vpop.f32.mrf.mxu0
    %219 = vmatprep.mubr.f32.mxu0 0.0
    %220 = vmatmul.mubr.f32.gmra.mxu0 %v118
    %v221 = vpop.f32.mrf.mxu0
    %v222 = vadd.f32 %v93, %v221
    %v223 = vpop.f32.mrf.mxu0
    %224 = vdwg.mxu0
    %v225 = vtanh.pop %v187
    %v226 = vtanh.pop %v192
    %v227 = vtanh.pop %v197
    %v228 = vtanh.pop %v202
    %v229 = vtanh.pop %v207
    %v230 = vtanh.pop %v212
    %v231 = vtanh.pop %v217
    %v232 = vtanh.pop %v222
    %v233 = vld [vmem:[%s3] sm:$0xff]
    %v234 = vld [vmem:[%s3 + $0x8] sm:$0xff]
    %v235 = vld [vmem:[%s3 + $0x10] sm:$0xff]
    %v236 = vld [vmem:[%s3 + $0x18] sm:$0xff]
    %v237 = vld [vmem:[%s3 + $0x20] sm:$0xff]
    %v238 = vld [vmem:[%s3 + $0x28] sm:$0xff]
    %v239 = vld [vmem:[%s3 + $0x30] sm:$0xff]
    %v240 = vld [vmem:[%s3 + $0x38] sm:$0xff]
    %v241 = vld [vmem:[%s4] sm:$0xff]
    %v242 = vld [vmem:[%s4 + $0x8] sm:$0xff]
    %v243 = vld [vmem:[%s4 + $0x10] sm:$0xff]
    %v244 = vld [vmem:[%s4 + $0x18] sm:$0xff]
    %v245 = vld [vmem:[%s4 + $0x20] sm:$0xff]
    %v246 = vld [vmem:[%s4 + $0x28] sm:$0xff]
    %v247 = vld [vmem:[%s4 + $0x30] sm:$0xff]
    %v248 = vld [vmem:[%s4 + $0x38] sm:$0xff]
    %250 = vset.pattern.permute.xlu0 0
    %251 = vperm.xlu0 %250, %v241
    %v252 = vpop.permute.xlu0 %251
    %255 = vset.pattern.permute.xlu0 0
    %256 = vperm.xlu0 %255, %v242
    %v257 = vpop.permute.xlu0 %256
    %260 = vset.pattern.permute.xlu0 0
    %261 = vperm.xlu0 %260, %v243
    %v262 = vpop.permute.xlu0 %261
    %265 = vset.pattern.permute.xlu0 0
    %266 = vperm.xlu0 %265, %v244
    %v267 = vpop.permute.xlu0 %266
    %270 = vset.pattern.permute.xlu0 0
    %271 = vperm.xlu0 %270, %v245
    %v272 = vpop.permute.xlu0 %271
    %275 = vset.pattern.permute.xlu0 0
    %276 = vperm.xlu0 %275, %v246
    %v277 = vpop.permute.xlu0 %276
    %280 = vset.pattern.permute.xlu0 0
    %281 = vperm.xlu0 %280, %v247
    %v282 = vpop.permute.xlu0 %281
    %285 = vset.pattern.permute.xlu0 0
    %286 = vperm.xlu0 %285, %v248
    %v287 = vpop.permute.xlu0 %286
    %vm289 = vcmask 523264
    %v291 = vsel %vm289, %v233, 0
    %v294 = vsel %vm289, %v234, 0
    %v297 = vsel %vm289, %v235, 0
    %v300 = vsel %vm289, %v236, 0
    %v303 = vsel %vm289, %v237, 0
    %v306 = vsel %vm289, %v238, 0
    %v309 = vsel %vm289, %v239, 0
    %v312 = vsel %vm289, %v240, 0
    %314 = vmatprep.subr.mxu0 0.0
    %315 = vmatpush1.msra.mxu0 0.0
    %316 = vmatprep.subr.mxu0 0.0
    %317 = vmatpush1.msra.mxu0 0.0
    %318 = vmatprep.subr.mxu0 0.0
    %319 = vmatpush1.msra.mxu0 0.0
    %320 = vmatprep.subr.mxu0 0.0
    %321 = vmatpush1.msra.mxu0 0.0
    %322 = vmatprep.subr.mxu0 0.0
    %323 = vmatpush1.msra.mxu0 0.0
    %324 = vmatprep.subr.mxu0 0.0
    %325 = vmatpush1.msra.mxu0 0.0
    %326 = vmatprep.subr.mxu0 0.0
    %327 = vmatpush1.msra.mxu0 0.0
    %328 = vmatprep.subr.mxu0 0.0
    %329 = vmatpush1.msra.mxu0 0.0
    %330 = vmatprep.subr.mxu0 0.0
    %331 = vmatpush1.msra.mxu0 %v232
    %332 = vmatprep.subr.mxu0 0.0
    %333 = vmatpush1.msra.mxu0 %v231
    %334 = vmatprep.subr.mxu0 0.0
    %335 = vmatpush1.msra.mxu0 %v230
    %336 = vmatprep.subr.mxu0 0.0
    %337 = vmatpush1.msra.mxu0 %v229
    %338 = vmatprep.subr.mxu0 0.0
    %339 = vmatpush1.msra.mxu0 %v228
    %340 = vmatprep.subr.mxu0 0.0
    %341 = vmatpush1.msra.mxu0 %v227
    %342 = vmatprep.subr.mxu0 0.0
    %343 = vmatpush1.msra.mxu0 %v226
    %344 = vmatprep.subr.mxu0 0.0
    %345 = vmatpush1.msra.mxu0 %v225
    %346 = vmatprep.subr.mxu0 0.0
    %347 = vmatpush2.msra.mxu0 0.0
    %348 = vmatprep.subr.mxu0 0.0
    %349 = vmatpush2.msra.mxu0 0.0
    %350 = vmatprep.subr.mxu0 0.0
    %351 = vmatpush2.msra.mxu0 0.0
    %352 = vmatprep.subr.mxu0 0.0
    %353 = vmatpush2.msra.mxu0 0.0
    %354 = vmatprep.subr.mxu0 0.0
    %355 = vmatpush2.msra.mxu0 0.0
    %356 = vmatprep.subr.mxu0 0.0
    %357 = vmatpush2.msra.mxu0 0.0
    %358 = vmatprep.subr.mxu0 0.0
    %359 = vmatpush2.msra.mxu0 0.0
    %360 = vmatprep.subr.mxu0 0.0
    %361 = vmatpush2.msra.mxu0 0.0
    %362 = vmatprep.subr.mxu0 0.0
    %363 = vmatpush2.msra.mxu0 0.0
    %364 = vmatprep.subr.mxu0 0.0
    %365 = vmatpush2.msra.mxu0 0.0
    %366 = vmatprep.subr.mxu0 0.0
    %367 = vmatpush2.msra.mxu0 0.0
    %368 = vmatprep.subr.mxu0 0.0
    %369 = vmatpush2.msra.mxu0 0.0
    %370 = vmatprep.subr.mxu0 0.0
    %371 = vmatpush2.msra.mxu0 0.0
    %372 = vmatprep.subr.mxu0 0.0
    %373 = vmatpush2.msra.mxu0 0.0
    %374 = vmatprep.subr.mxu0 0.0
    %375 = vmatpush2.msra.mxu0 0.0
    %376 = vmatprep.subr.mxu0 0.0
    %377 = vmatpush2.msra.mxu0 0.0
    %378 = vmatprep.mubr.f32.mxu0 0.0
    %379 = vmatmul.mubr.f32.gmra.mxu0 %v291
    %v380 = vpop.f32.mrf.mxu0
    %v381 = vadd.f32 %v252, %v380
    %v382 = vpop.f32.mrf.mxu0
    %383 = vmatprep.mubr.f32.mxu0 0.0
    %384 = vmatmul.mubr.f32.gmra.mxu0 %v294
    %v385 = vpop.f32.mrf.mxu0
    %v386 = vadd.f32 %v257, %v385
    %v387 = vpop.f32.mrf.mxu0
    %388 = vmatprep.mubr.f32.mxu0 0.0
    %389 = vmatmul.mubr.f32.gmra.mxu0 %v297
    %v390 = vpop.f32.mrf.mxu0
    %v391 = vadd.f32 %v262, %v390
    %v392 = vpop.f32.mrf.mxu0
    %393 = vmatprep.mubr.f32.mxu0 0.0
    %394 = vmatmul.mubr.f32.gmra.mxu0 %v300
    %v395 = vpop.f32.mrf.mxu0
    %v396 = vadd.f32 %v267, %v395
    %v397 = vpop.f32.mrf.mxu0
    %398 = vmatprep.mubr.f32.mxu0 0.0
    %399 = vmatmul.mubr.f32.gmra.mxu0 %v303
    %v400 = vpop.f32.mrf.mxu0
    %v401 = vadd.f32 %v272, %v400
    %v402 = vpop.f32.mrf.mxu0
    %403 = vmatprep.mubr.f32.mxu0 0.0
    %404 = vmatmul.mubr.f32.gmra.mxu0 %v306
    %v405 = vpop.f32.mrf.mxu0
    %v406 = vadd.f32 %v277, %v405
    %v407 = vpop.f32.mrf.mxu0
    %408 = vmatprep.mubr.f32.mxu0 0.0
    %409 = vmatmul.mubr.f32.gmra.mxu0 %v309
    %v410 = vpop.f32.mrf.mxu0
    %v411 = vadd.f32 %v282, %v410
    %v412 = vpop.f32.mrf.mxu0
    %413 = vmatprep.mubr.f32.mxu0 0.0
    %414 = vmatmul.mubr.f32.gmra.mxu0 %v312
    %v415 = vpop.f32.mrf.mxu0
    %v416 = vadd.f32 %v287, %v415
    %v417 = vpop.f32.mrf.mxu0
    %418 = vdwg.mxu0
    %v419 = vtanh.pop %v381
    %v420 = vtanh.pop %v386
    %v421 = vtanh.pop %v391
    %v422 = vtanh.pop %v396
    %v423 = vtanh.pop %v401
    %v424 = vtanh.pop %v406
    %v425 = vtanh.pop %v411
    %v426 = vtanh.pop %v416
    %v427 = vld [vmem:[%s5] sm:$0xf]
    %v428 = vld [vmem:[%s6] sm:$0xf]
    %430 = vset.pattern.permute.xlu0 0
    %431 = vperm.xlu0 %430, %v428
    %v432 = vpop.permute.xlu0 %431
    %v435 = vsel %vm289, %v427, 0
    %437 = vmatprep.subr.mxu0 0.0
    %438 = vmatpush1.msra.mxu0 0.0
    %439 = vmatprep.subr.mxu0 0.0
    %440 = vmatpush1.msra.mxu0 0.0
    %441 = vmatprep.subr.mxu0 0.0
    %442 = vmatpush1.msra.mxu0 0.0
    %443 = vmatprep.subr.mxu0 0.0
    %444 = vmatpush1.msra.mxu0 0.0
    %445 = vmatprep.subr.mxu0 0.0
    %446 = vmatpush1.msra.mxu0 0.0
    %447 = vmatprep.subr.mxu0 0.0
    %448 = vmatpush1.msra.mxu0 0.0
    %449 = vmatprep.subr.mxu0 0.0
    %450 = vmatpush1.msra.mxu0 0.0
    %451 = vmatprep.subr.mxu0 0.0
    %452 = vmatpush1.msra.mxu0 0.0
    %453 = vmatprep.subr.mxu0 0.0
    %454 = vmatpush1.msra.mxu0 %v426
    %455 = vmatprep.subr.mxu0 0.0
    %456 = vmatpush1.msra.mxu0 %v425
    %457 = vmatprep.subr.mxu0 0.0
    %458 = vmatpush1.msra.mxu0 %v424
    %459 = vmatprep.subr.mxu0 0.0
    %460 = vmatpush1.msra.mxu0 %v423
    %461 = vmatprep.subr.mxu0 0.0
    %462 = vmatpush1.msra.mxu0 %v422
    %463 = vmatprep.subr.mxu0 0.0
    %464 = vmatpush1.msra.mxu0 %v421
    %465 = vmatprep.subr.mxu0 0.0
    %466 = vmatpush1.msra.mxu0 %v420
    %467 = vmatprep.subr.mxu0 0.0
    %468 = vmatpush1.msra.mxu0 %v419
    %469 = vmatprep.subr.mxu0 0.0
    %470 = vmatpush2.msra.mxu0 0.0
    %471 = vmatprep.subr.mxu0 0.0
    %472 = vmatpush2.msra.mxu0 0.0
    %473 = vmatprep.subr.mxu0 0.0
    %474 = vmatpush2.msra.mxu0 0.0
    %475 = vmatprep.subr.mxu0 0.0
    %476 = vmatpush2.msra.mxu0 0.0
    %477 = vmatprep.subr.mxu0 0.0
    %478 = vmatpush2.msra.mxu0 0.0
    %479 = vmatprep.subr.mxu0 0.0
    %480 = vmatpush2.msra.mxu0 0.0
    %481 = vmatprep.subr.mxu0 0.0
    %482 = vmatpush2.msra.mxu0 0.0
    %483 = vmatprep.subr.mxu0 0.0
    %484 = vmatpush2.msra.mxu0 0.0
    %485 = vmatprep.subr.mxu0 0.0
    %486 = vmatpush2.msra.mxu0 0.0
    %487 = vmatprep.subr.mxu0 0.0
    %488 = vmatpush2.msra.mxu0 0.0
    %489 = vmatprep.subr.mxu0 0.0
    %490 = vmatpush2.msra.mxu0 0.0
    %491 = vmatprep.subr.mxu0 0.0
    %492 = vmatpush2.msra.mxu0 0.0
    %493 = vmatprep.subr.mxu0 0.0
    %494 = vmatpush2.msra.mxu0 0.0
    %495 = vmatprep.subr.mxu0 0.0
    %496 = vmatpush2.msra.mxu0 0.0
    %497 = vmatprep.subr.mxu0 0.0
    %498 = vmatpush2.msra.mxu0 0.0
    %499 = vmatprep.subr.mxu0 0.0
    %500 = vmatpush2.msra.mxu0 0.0
    %501 = vmatprep.mubr.f32.mxu0 0.0
    %502 = vmatmul.mubr.f32.gmra.mxu0 %v435
    %v503 = vpop.f32.mrf.mxu0
    %v504 = vadd.f32 %v432, %v503
    %v505 = vpop.f32.mrf.mxu0
    %506 = vdwg.mxu0
    %v507 = vld [vmem:[%s9] sm:$0xf]
    %v508 = vld [vmem:[%s7] sm:$0xf]
    %510 = vset.pattern.permute.xlu0 0
    %511 = vperm.xlu0 %510, %v508
    %v512 = vpop.permute.xlu0 %511
    %v514 = vmul.f32 %v512, %v507
    %v515 = vadd.f32 %v504, %v514
    %v516 = vmul.f32 %v507, %v507
    %vm517 = vcmask 1043456
    %v518 = vsel %vm517, %v516, 0.0
    %v519 = vrot.slane %v518, 4
    %v520 = vadd.f32 %v518, %v519
    %v521 = vrot.slane %v520, 2
    %v522 = vadd.f32 %v520, %v521
    %v523 = vrot.slane %v522, 1
    %v524 = vadd.f32 %v522, %v523
    %v525 = vmul.f32 %v524, -0.5
    %v526 = vld [vmem:[#allocation2] sm:$0x1]
    %528 = vset.pattern.permute.xlu0 0
    %529 = vperm.xlu0 %528, %v526
    %v530 = vpop.permute.xlu0 %529
    %v532 = vlaneseq
    %v533 = vshrl.u32 %v532, 7
    %v534 = vsub.s32 0, %v533
    %v535 = vrot.slane %v530, %v534
    %v536 = vsub.f32 %v525, %v535
    %537 = vst [vmem:[#allocation3] sm:$0xf] %v504
    %538 = vst [vmem:[#allocation3 + $0x4] sm:$0xf] %v515
    %539 = vst [vmem:[#allocation3 + $0x8] sm:$0x1] %v536
    // Predicated region
    $region42: #{tpu_custom_call.1} parent=1 // pred_check
      _
    $region43: #{tpu_custom_call.1} parent=1 // pred_check_branch
      %541 = sbr.rel (0) target = $region45
    $region44: #{tpu_custom_call.1} parent=1 // pred_region
      %s543 = ssub.s32 256, 256
      %544 = vsyncadd [#allocation4], %s543
      %s545 = sshll.u32 [#allocation3], 4
      %s546 = int_to_ptr.vmem [resolvable:$true] %s545
      %551 = dma.vmem_to_hbm [thread:$0]  %s546, 256, %s10, [#allocation4], 128, 128, 8
    $region45: #{tpu_custom_call.1} parent=1 // pred_fallthru
      _
    // Predicated region
    $region46: #{tpu_custom_call.1} parent=1 // pred_check
      _
    $region47: #{tpu_custom_call.1} parent=1 // pred_check_branch
      %553 = sbr.rel (0) target = $region49
    $region48: #{tpu_custom_call.1} parent=1 // pred_region
      %554 = dma.done [#allocation4], 256
    $region49: #{tpu_custom_call.1} parent=1 // pred_fallthru
      _
    %555 = vsyncpa [#allocation4], 1

</llo_original>
